<compile_context>
chip_gen: v5e
topology: v5e:2x2
jax: 0.10.0
libtpu: 0.0.40
codegen_flags: <defaults>
</compile_context>

<pallas_src>
import functools

import jax
import jax.numpy as jnp
from jax.experimental import pallas as pl
from jax.experimental.pallas import tpu as pltpu


def _round_up(v, m):
    return ((v + m - 1) // m) * m


def _tiles_for(num_nodes, tm_max=256, tk_max=512):
    """Row-tile / K-tile sizes and padded extents for an N x N adjacency."""
    tm = min(tm_max, _round_up(num_nodes, 8))      # second-to-last dim: /8
    tk = min(tk_max, _round_up(num_nodes, 128))    # last dim: /128
    mp = _round_up(num_nodes, tm)
    kp = _round_up(num_nodes, tk)
    return tm, tk, mp, kp


def _sage_conv_kernel(adj_ref, xl_ref, rhs_ref, o_ref, acc_ref, *, activation):
    """One (row-tile i, K-tile k) step of  out = act(adj @ xl + rhs).

    adj_ref : [tm, tk] bf16  row-normalized adjacency tile
    xl_ref  : [tk, Cp] bf16  (x @ W_l) rows for this K tile
    rhs_ref : [tm, Cp] f32   x @ W_r + b_l for this row tile (epilogue only)
    acc_ref : [tm, Cp] f32   VMEM accumulator, resident across the K axis
    """
    k = pl.program_id(1)

    @pl.when(k == 0)
    def _():
        acc_ref[...] = jnp.zeros_like(acc_ref)

    acc_ref[...] += jnp.dot(adj_ref[...], xl_ref[...],
                            preferred_element_type=jnp.float32)

    @pl.when(k == pl.num_programs(1) - 1)
    def _():
        out = acc_ref[...] + rhs_ref[...]
        if activation == "relu":
            out = jnp.maximum(out, 0.0)
        elif activation == "sigmoid":
            out = 1.0 / (1.0 + jnp.exp(-out))
        o_ref[...] = out.astype(o_ref.dtype)


def sage_conv(adj_p, num_nodes, x, w_l, w_r, b_l, *, activation=None, tm, tk):
    """PyG SAGEConv forward (mean aggr) + optional fused activation.

    adj_p : [Mp, Kp] bf16  padded row-normalized adjacency (shared per graph)
    x     : [N, Cin] f32, w_l/w_r : [Cin, Cout], b_l : [Cout]
    Returns [N, Cout] f32.
    """
    n = num_nodes
    cout = w_l.shape[1]
    mp, kp = adj_p.shape
    cp = _round_up(max(cout, 128), 128)            # lane-dense output width

    # Tiny projections in XLA; the O(N^2) aggregation fused with lin_l runs
    # in the Pallas kernel on a Cout-wide operand.
    xf = x.astype(jnp.float32)
    xl = (xf @ w_l).astype(jnp.bfloat16)                       # [N, Cout]
    rhs = (xf @ w_r + b_l[None, :]).astype(jnp.float32)        # [N, Cout]

    xl_p = jnp.zeros((kp, cp), jnp.bfloat16).at[:n, :cout].set(xl)
    rhs_p = jnp.zeros((mp, cp), jnp.float32).at[:n, :cout].set(rhs)

    grid = (mp // tm, kp // tk)
    out = pl.pallas_call(
        functools.partial(_sage_conv_kernel, activation=activation),
        out_shape=jax.ShapeDtypeStruct((mp, cp), jnp.float32),
        grid_spec=pltpu.PrefetchScalarGridSpec(
            num_scalar_prefetch=0,
            grid=grid,
            in_specs=[
                pl.BlockSpec((tm, tk), lambda i, k: (i, k)),   # adj tile
                pl.BlockSpec((tk, cp), lambda i, k: (k, 0)),   # xl tile
                pl.BlockSpec((tm, cp), lambda i, k: (i, 0)),   # rhs tile
            ],
            out_specs=pl.BlockSpec((tm, cp), lambda i, k: (i, 0)),
            scratch_shapes=[pltpu.VMEM((tm, cp), jnp.float32)],
        ),
        compiler_params=pltpu.CompilerParams(
            dimension_semantics=("parallel", "arbitrary"),
            vmem_limit_bytes=48 * 1024 * 1024,
        ),
    )(adj_p, xl_p, rhs_p)
    return out[:n, :cout]


def build_mean_adjacency(edge_index, num_nodes, mp, kp):
    """Dense row-normalized adjacency A[dst, src] = 1/deg_in(dst), padded & bf16."""
    # TODO(synk): for sparse graphs with large N, replace this dense O(N^2)
    # path with a CSR scalar-prefetch + manual-DMA gather kernel (O(E) traffic).
    src, dst = edge_index[0], edge_index[1]
    ones = jnp.ones(src.shape, jnp.float32)
    adj = jnp.zeros((num_nodes, num_nodes), jnp.float32).at[dst, src].add(ones)
    deg = jnp.sum(adj, axis=1, keepdims=True)
    adj = adj / jnp.maximum(deg, 1.0)              # no in-edges -> aggregates 0
    return jnp.zeros((mp, kp), jnp.bfloat16).at[:num_nodes, :num_nodes].set(
        adj.astype(jnp.bfloat16))


def my_sage_cvae_forward(params, x, edge_index, l, batch_size, eps):
    """Functional equivalent of mySAGEcVAE.forward -> (l_out, z_mu, z_log_var).

    Dropout modules are defined in the PyTorch model but never applied in any
    forward(), and reparameterization's torch.randn is supplied as `eps`.
    """
    n = x.shape[0]
    z_dim = eps.shape[1]
    tm, tk, mp, kp = _tiles_for(n)
    adj_p = build_mean_adjacency(edge_index, n, mp, kp)   # built once, reused 4x
    conv = functools.partial(sage_conv, adj_p, n, tm=tm, tk=tk)

    # --- SAGEGraphEmbedding: single conv (no activation in its forward) ---
    c = conv(x, params["emb_wl"], params["emb_wr"], params["emb_bl"])

    # --- SAGEEncoder: conv -> ReLU -> Linear -> per-graph mean ---
    z_in = jnp.concatenate([l[:, None], c], axis=1)
    h = conv(z_in, params["enc_wl"], params["enc_wr"], params["enc_bl"],
             activation="relu")
    h = h @ params["lin_w"] + params["lin_b"][None, :]
    h = h.reshape(batch_size, -1, h.shape[1]).mean(axis=1)
    z_mu, z_log_var = h[:, :z_dim], h[:, z_dim:]

    # --- reparameterization + broadcast z to the nodes of each graph ---
    z = z_mu + jnp.exp(z_log_var / 2.0) * eps
    z_next = jnp.repeat(z, n // batch_size, axis=0)

    # --- SAGEDecoder: conv -> ReLU -> conv -> sigmoid ---
    z_dec = jnp.concatenate([z_next, c], axis=1)
    h = conv(z_dec, params["dec1_wl"], params["dec1_wr"], params["dec1_bl"],
             activation="relu")
    l_out = conv(h, params["dec2_wl"], params["dec2_wr"], params["dec2_bl"],
                 activation="sigmoid")
    return l_out, z_mu, z_log_var


# ------------------------- pure-JAX f32 reference -------------------------

def _sage_conv_ref(x, edge_index, w_l, w_r, b_l):
    n = x.shape[0]
    src, dst = edge_index[0], edge_index[1]
    agg = jnp.zeros((n, x.shape[1]), jnp.float32).at[dst].add(x[src])
    cnt = jnp.zeros((n, 1), jnp.float32).at[dst].add(1.0)
    agg = agg / jnp.maximum(cnt, 1.0)
    return agg @ w_l + x @ w_r + b_l[None, :]


def _reference_forward(params, x, edge_index, l, batch_size, eps):
    n = x.shape[0]
    z_dim = eps.shape[1]
    c = _sage_conv_ref(x, edge_index, params["emb_wl"], params["emb_wr"],
                       params["emb_bl"])
    z_in = jnp.concatenate([l[:, None], c], axis=1)
    h = jnp.maximum(_sage_conv_ref(z_in, edge_index, params["enc_wl"],
                                   params["enc_wr"], params["enc_bl"]), 0.0)
    h = h @ params["lin_w"] + params["lin_b"][None, :]
    h = h.reshape(batch_size, -1, h.shape[1]).mean(axis=1)
    z_mu, z_log_var = h[:, :z_dim], h[:, z_dim:]
    z = z_mu + jnp.exp(z_log_var / 2.0) * eps
    z_next = jnp.repeat(z, n // batch_size, axis=0)
    z_dec = jnp.concatenate([z_next, c], axis=1)
    h = jnp.maximum(_sage_conv_ref(z_dec, edge_index, params["dec1_wl"],
                                   params["dec1_wr"], params["dec1_bl"]), 0.0)
    l_out = jax.nn.sigmoid(_sage_conv_ref(h, edge_index, params["dec2_wl"],
                                          params["dec2_wr"], params["dec2_bl"]))
    return l_out, z_mu, z_log_var


if __name__ == "__main__":
    key = jax.random.PRNGKey(0)
    keys = jax.random.split(key, 16)

    batch_size = 2
    nodes_per_graph = 8
    N = batch_size * nodes_per_graph        # 16 nodes
    E = 48                                  # 48 edges
    embedding_in_channels = 8
    embedding_channels = 64
    en_hidden_channels = 32
    de_hidden_channels = 32
    z_dim = 16

    def init_w(k, cin, cout):
        return jax.random.normal(k, (cin, cout), jnp.float32) * 0.1

    params = {
        "emb_wl": init_w(keys[0], embedding_in_channels, embedding_channels),
        "emb_wr": init_w(keys[1], embedding_in_channels, embedding_channels),
        "emb_bl": jax.random.normal(keys[2], (embedding_channels,), jnp.float32) * 0.1,
        "enc_wl": init_w(keys[3], embedding_channels + 1, en_hidden_channels),
        "enc_wr": init_w(keys[4], embedding_channels + 1, en_hidden_channels),
        "enc_bl": jax.random.normal(keys[5], (en_hidden_channels,), jnp.float32) * 0.1,
        "lin_w": init_w(keys[6], en_hidden_channels, 2 * z_dim),
        "lin_b": jax.random.normal(keys[7], (2 * z_dim,), jnp.float32) * 0.1,
        "dec1_wl": init_w(keys[8], embedding_channels + z_dim, de_hidden_channels),
        "dec1_wr": init_w(keys[9], embedding_channels + z_dim, de_hidden_channels),
        "dec1_bl": jax.random.normal(keys[10], (de_hidden_channels,), jnp.float32) * 0.1,
        "dec2_wl": init_w(keys[11], de_hidden_channels, 1),
        "dec2_wr": init_w(keys[12], de_hidden_channels, 1),
        "dec2_bl": jax.random.normal(keys[13], (1,), jnp.float32) * 0.1,
    }

    x = jax.random.normal(keys[14], (N, embedding_in_channels), jnp.float32)
    edge_index = jax.random.randint(keys[15], (2, E), 0, N, dtype=jnp.int32)
    k_l, k_eps = jax.random.split(jax.random.PRNGKey(1), 2)
    l_cond = jax.random.normal(k_l, (N,), jnp.float32)
    eps = jax.random.normal(k_eps, (batch_size, z_dim), jnp.float32)

    l_out, z_mu, z_log_var = jax.block_until_ready(
        my_sage_cvae_forward(params, x, edge_index, l_cond, batch_size, eps))

    l_ref, mu_ref, lv_ref = _reference_forward(params, x, edge_index, l_cond,
                                               batch_size, eps)

    assert l_out.shape == (N, 1)
    assert z_mu.shape == (batch_size, z_dim)
    assert z_log_var.shape == (batch_size, z_dim)
    # bf16 adjacency / x@W_l on the MXU -> allow ~1e-2 level deviation.
    assert jnp.allclose(z_mu, mu_ref, atol=2e-2, rtol=2e-2)
    assert jnp.allclose(z_log_var, lv_ref, atol=2e-2, rtol=2e-2)
    assert jnp.allclose(l_out, l_ref, atol=2e-2, rtol=2e-2)

    print("KERNEL_OK")
</pallas_src>

<mosaic_0001>
module attributes {stable_mosaic.version = 11 : i64} {
  func.func @_sage_conv_kernel(%arg0: i32, %arg1: i32, %arg2: memref<16x128xbf16, #tpu.memory_space<vmem>>, %arg3: memref<128x128xbf16, #tpu.memory_space<vmem>>, %arg4: memref<16x128xf32, #tpu.memory_space<vmem>>, %arg5: memref<16x128xf32, #tpu.memory_space<vmem>>, %arg6: memref<16x128xf32, #tpu.memory_space<vmem>>) attributes {dimension_semantics = [#tpu.dimension_semantics<parallel>, #tpu.dimension_semantics<arbitrary>], iteration_bounds = array<i64: 1, 1>, scalar_prefetch = 0 : i64, scratch_operands = 1 : i64, tpu.core_type = #tpu.core_type<tc>, window_params = [{transform_indices = @transform_0, window_bounds = array<i64: 16, 128>}, {transform_indices = @transform_1, window_bounds = array<i64: 128, 128>}, {transform_indices = @transform_2, window_bounds = array<i64: 16, 128>}, {transform_indices = @transform_3, window_bounds = array<i64: 16, 128>}]} {
    %c0_i32 = arith.constant 0 : i32
    %0 = arith.cmpi eq, %arg1, %c0_i32 : i32
    %1 = arith.extui %0 : i1 to i32
    %c0_i32_0 = arith.constant 0 : i32
    %2 = arith.cmpi ne, %1, %c0_i32_0 : i32
    scf.if %2 {
      %cst_10 = arith.constant 0.000000e+00 : f32
      %12 = vector.broadcast %cst_10 : f32 to vector<16x128xf32>
      %c0_11 = arith.constant 0 : index
      %c0_12 = arith.constant 0 : index
      %13 = vector.load %arg6[%c0_11, %c0_12] : memref<16x128xf32, #tpu.memory_space<vmem>>, vector<16x128xf32>
      tpu.vector_store %arg6[%c0_11, %c0_12], %12 {strides = array<i32>} : memref<16x128xf32, #tpu.memory_space<vmem>>, vector<16x128xf32>,
    } else {
    }
    %c0 = arith.constant 0 : index
    %c0_1 = arith.constant 0 : index
    %3 = vector.load %arg6[%c0, %c0_1] : memref<16x128xf32, #tpu.memory_space<vmem>>, vector<16x128xf32>
    %c0_2 = arith.constant 0 : index
    %c0_3 = arith.constant 0 : index
    %4 = vector.load %arg2[%c0_2, %c0_3] : memref<16x128xbf16, #tpu.memory_space<vmem>>, vector<16x128xbf16>
    %c0_4 = arith.constant 0 : index
    %c0_5 = arith.constant 0 : index
    %5 = vector.load %arg3[%c0_4, %c0_5] : memref<128x128xbf16, #tpu.memory_space<vmem>>, vector<128x128xbf16>
    %cst = arith.constant dense<0.000000e+00> : vector<16x128xf32>
    %6 = tpu.matmul %4, %5, %cst {dimension_numbers = #tpu.dot_dimension_numbers<[1], [0], [0], [1], [0, 0, 1, 1], [], []>} : vector<16x128xbf16>, vector<128x128xbf16>, vector<16x128xf32> -> vector<16x128xf32>
    %7 = arith.addf %3, %6 : vector<16x128xf32>
    %c0_6 = arith.constant 0 : index
    %c0_7 = arith.constant 0 : index
    %8 = vector.load %arg6[%c0_6, %c0_7] : memref<16x128xf32, #tpu.memory_space<vmem>>, vector<16x128xf32>
    tpu.vector_store %arg6[%c0_6, %c0_7], %7 {strides = array<i32>} : memref<16x128xf32, #tpu.memory_space<vmem>>, vector<16x128xf32>,
    %c0_i32_8 = arith.constant 0 : i32
    %9 = arith.cmpi eq, %arg1, %c0_i32_8 : i32
    %10 = arith.extui %9 : i1 to i32
    %c0_i32_9 = arith.constant 0 : i32
    %11 = arith.cmpi ne, %10, %c0_i32_9 : i32
    scf.if %11 {
      %c0_10 = arith.constant 0 : index
      %c0_11 = arith.constant 0 : index
      %12 = vector.load %arg6[%c0_10, %c0_11] : memref<16x128xf32, #tpu.memory_space<vmem>>, vector<16x128xf32>
      %c0_12 = arith.constant 0 : index
      %c0_13 = arith.constant 0 : index
      %13 = vector.load %arg4[%c0_12, %c0_13] : memref<16x128xf32, #tpu.memory_space<vmem>>, vector<16x128xf32>
      %14 = arith.addf %12, %13 : vector<16x128xf32>
      %c0_14 = arith.constant 0 : index
      %c0_15 = arith.constant 0 : index
      %15 = vector.load %arg5[%c0_14, %c0_15] : memref<16x128xf32, #tpu.memory_space<vmem>>, vector<16x128xf32>
      tpu.vector_store %arg5[%c0_14, %c0_15], %14 {strides = array<i32>} : memref<16x128xf32, #tpu.memory_space<vmem>>, vector<16x128xf32>,
    } else {
    }
    return
  }
  func.func @transform_0(%arg0: i32, %arg1: i32) -> (i32, i32) {
    %c0_i32 = arith.constant 0 : i32
    return %arg0, %arg1 : i32, i32
  }
  func.func @transform_1(%arg0: i32, %arg1: i32) -> (i32, i32) {
    %c0_i32 = arith.constant 0 : i32
    %c0_i32_0 = arith.constant 0 : i32
    return %arg1, %c0_i32 : i32, i32
  }
  func.func @transform_2(%arg0: i32, %arg1: i32) -> (i32, i32) {
    %c0_i32 = arith.constant 0 : i32
    %c0_i32_0 = arith.constant 0 : i32
    return %arg0, %c0_i32 : i32, i32
  }
  func.func @transform_3(%arg0: i32, %arg1: i32) -> (i32, i32) {
    %c0_i32 = arith.constant 0 : i32
    %c0_i32_0 = arith.constant 0 : i32
    return %arg0, %c0_i32 : i32, i32
  }
}

</mosaic_0001>

<llo_original>
// kernel: tpu_custom_call.1
$region0: #{tpu_custom_call.1}
  #allocation0 [shape = 'u32[]', space=smem, size = 0x4, offset = 0x4, fixed_abs, tag = 'smem constant byte address 0x4 - core index']
  #allocation1 [shape = 'u32[72,128]{1,0:T(1,128)}', space=vmem, size = 0x9000, scoped, tag = 'internal scratch']
  #allocation2 [shape = 'f32[16,128]{1,0:T(8,128)}', space=vmem, size = 0x2000, scoped, tag = 'scratch operand']
  %s0 = inlined_call_operand.hbm [shape: bf16[16,128], index: 0, kind: input, shape index: {}]
  %s1 = inlined_call_operand.hbm [shape: bf16[128,128], index: 1, kind: input, shape index: {}]
  %s2 = inlined_call_operand.hbm [shape: f32[16,128], index: 2, kind: input, shape index: {}]
  %s3 = inlined_call_operand.hbm [shape: f32[16,128], index: 3, kind: output, shape index: {}]
  %s4 = sld [smem:[#allocation0]]
  $region42: #{tpu_custom_call.1} parent=0
    _
  %s6 = ssub.s32 1, %s4
  %s7 = scalar_select 0, %s6, %s4
  $region1: #{tpu_custom_call.1} parent=0
    #allocation3 [shape = 'u8[4096]{0}', space=vmem, size = 0x1000, scoped, tag = 'input window, operand 0, single buffered']
    #allocation4 [shape = 's32[1]{0}', space=sflag, size = 0x4, scoped, tag = 'scoped memory for tpu_custom_call.1']
    #allocation5 [shape = 's32[1]{0}', space=sflag, size = 0x4, scoped, tag = 'scoped memory for tpu_custom_call.1']
    #allocation6 [shape = 'u8[32768]{0}', space=vmem, size = 0x8000, scoped, tag = 'input window, operand 1, single buffered']
    #allocation7 [shape = 's32[1]{0}', space=sflag, size = 0x4, scoped, tag = 'scoped memory for tpu_custom_call.1']
    #allocation8 [shape = 'u8[8192]{0}', space=vmem, size = 0x2000, scoped, tag = 'input window, operand 2, single buffered']
    #allocation9 [shape = 'u8[8192]{0}', space=vmem, size = 0x2000, scoped, tag = 'output window, operand 0, single buffered']
    %8 = vsyncpa [#allocation4], 0
    %9 = vsyncpa [#allocation7], 0
    %10 = vsyncpa [#allocation5], 0
    // Predicated region
    $region2: #{tpu_custom_call.1} parent=1 // pred_check
      _
    $region3: #{tpu_custom_call.1} parent=1 // pred_check_branch
      %12 = sbr.rel (0) target = $region5
    $region4: #{tpu_custom_call.1} parent=1 // pred_region
      %14 = vsyncadd [#allocation4], 0
      %s15 = sshll.u32 %s0, 4
      %s16 = int_to_ptr.hbm [resolvable:$true] %s15
      %s17 = sshll.u32 [#allocation3], 4
      %s18 = int_to_ptr.vmem [resolvable:$true] %s17
      %23 = dma.hbm_to_vmem [thread:$0]  %s16, 128, %s18, [#allocation4], 64, 64, 4
    $region5: #{tpu_custom_call.1} parent=1 // pred_fallthru
      _
    // Predicated region
    $region6: #{tpu_custom_call.1} parent=1 // pred_check
      _
    $region7: #{tpu_custom_call.1} parent=1 // pred_check_branch
      %25 = sbr.rel (0) target = $region9
    $region8: #{tpu_custom_call.1} parent=1 // pred_region
      %27 = vsyncadd [#allocation7], 0
      %s28 = sshll.u32 %s1, 4
      %s29 = int_to_ptr.hbm [resolvable:$true] %s28
      %s30 = sshll.u32 [#allocation6], 4
      %s31 = int_to_ptr.vmem [resolvable:$true] %s30
      %36 = dma.hbm_to_vmem [thread:$0]  %s29, 1024, %s31, [#allocation7], 64, 64, 4
    $region9: #{tpu_custom_call.1} parent=1 // pred_fallthru
      _
    // Predicated region
    $region10: #{tpu_custom_call.1} parent=1 // pred_check
      _
    $region11: #{tpu_custom_call.1} parent=1 // pred_check_branch
      %38 = sbr.rel (0) target = $region13
    $region12: #{tpu_custom_call.1} parent=1 // pred_region
      %40 = vsyncadd [#allocation7], 0
      %s41 = sshll.u32 %s2, 4
      %s42 = int_to_ptr.hbm [resolvable:$true] %s41
      %s43 = sshll.u32 [#allocation8], 4
      %s44 = int_to_ptr.vmem [resolvable:$true] %s43
      %49 = dma.hbm_to_vmem [thread:$0]  %s42, 256, %s44, [#allocation7], 128, 128, 8
    $region13: #{tpu_custom_call.1} parent=1 // pred_fallthru
      _
    // Predicated region
    $region14: #{tpu_custom_call.1} parent=1 // pred_check
      _
    $region15: #{tpu_custom_call.1} parent=1 // pred_check_branch
      %51 = sbr.rel (0) target = $region17
    $region16: #{tpu_custom_call.1} parent=1 // pred_region
      %53 = dma.done [#allocation4], 128
    $region17: #{tpu_custom_call.1} parent=1 // pred_fallthru
      _
    // Predicated region
    $region18: #{tpu_custom_call.1} parent=1 // pred_check
      _
    $region19: #{tpu_custom_call.1} parent=1 // pred_check_branch
      %55 = sbr.rel (0) target = $region21
    $region20: #{tpu_custom_call.1} parent=1 // pred_region
      %57 = dma.done [#allocation7], 1024
    $region21: #{tpu_custom_call.1} parent=1 // pred_fallthru
      _
    // Predicated region
    $region22: #{tpu_custom_call.1} parent=1 // pred_check
      _
    $region23: #{tpu_custom_call.1} parent=1 // pred_check_branch
      %59 = sbr.rel (0) target = $region25
    $region24: #{tpu_custom_call.1} parent=1 // pred_region
      %61 = dma.done [#allocation7], 256
    $region25: #{tpu_custom_call.1} parent=1 // pred_fallthru
      _
    %p62 = scmp.eq.s32.totalorder 0, 0
    // Predicated region
    $region26: #{tpu_custom_call.1} parent=1 // pred_check
      %p63 = pneg %p62
    $region27: #{tpu_custom_call.1} parent=1 // pred_check_branch
      %65 = sbr.rel (%p63) target = $region29
    $region28: #{tpu_custom_call.1} parent=1 // pred_region
      %66 = vst [vmem:[#allocation2] sm:$0xff] 0.0
      %67 = vst [vmem:[#allocation2 + $0x8] sm:$0xff] 0.0
    $region29: #{tpu_custom_call.1} parent=1 // pred_fallthru
      _
    %v68 = vld [vmem:[#allocation2] sm:$0xff]
    %v69 = vld [vmem:[#allocation2 + $0x8] sm:$0xff]
    %v70 = vld [vmem:[#allocation3] sm:$0xf]
    %v71 = vld [vmem:[#allocation3 + $0x4] sm:$0xf]
    %v72 = vld [vmem:[#allocation6] sm:$0xf]
    %v73 = vld [vmem:[#allocation6 + $0x4] sm:$0xf]
    %v74 = vld [vmem:[#allocation6 + $0x8] sm:$0xf]
    %v75 = vld [vmem:[#allocation6 + $0xc] sm:$0xf]
    %v76 = vld [vmem:[#allocation6 + $0x10] sm:$0xf]
    %v77 = vld [vmem:[#allocation6 + $0x14] sm:$0xf]
    %v78 = vld [vmem:[#allocation6 + $0x18] sm:$0xf]
    %v79 = vld [vmem:[#allocation6 + $0x1c] sm:$0xf]
    %v80 = vld [vmem:[#allocation6 + $0x20] sm:$0xf]
    %v81 = vld [vmem:[#allocation6 + $0x24] sm:$0xf]
    %v82 = vld [vmem:[#allocation6 + $0x28] sm:$0xf]
    %v83 = vld [vmem:[#allocation6 + $0x2c] sm:$0xf]
    %v84 = vld [vmem:[#allocation6 + $0x30] sm:$0xf]
    %v85 = vld [vmem:[#allocation6 + $0x34] sm:$0xf]
    %v86 = vld [vmem:[#allocation6 + $0x38] sm:$0xf]
    %v87 = vld [vmem:[#allocation6 + $0x3c] sm:$0xf]
    %v90 = vunpack.c.l.b16 %v70
    %v91 = vunpack.c.l.b16 %v71
    %v92 = vpack.c.b16 %v91, %v90
    %v110 = vunpack.c.l.b16 %v72
    %v111 = vunpack.c.l.b16 %v73
    %v112 = vunpack.c.l.b16 %v74
    %v113 = vunpack.c.l.b16 %v75
    %v114 = vunpack.c.l.b16 %v76
    %v115 = vunpack.c.l.b16 %v77
    %v116 = vunpack.c.l.b16 %v78
    %v117 = vunpack.c.l.b16 %v79
    %v118 = vunpack.c.l.b16 %v80
    %v119 = vunpack.c.l.b16 %v81
    %v120 = vunpack.c.l.b16 %v82
    %v121 = vunpack.c.l.b16 %v83
    %v122 = vunpack.c.l.b16 %v84
    %v123 = vunpack.c.l.b16 %v85
    %v124 = vunpack.c.l.b16 %v86
    %v125 = vunpack.c.l.b16 %v87
    %v126 = vpack.c.b16 %v111, %v110
    %v127 = vpack.c.b16 %v113, %v112
    %v128 = vpack.c.b16 %v115, %v114
    %v129 = vpack.c.b16 %v117, %v116
    %v130 = vpack.c.b16 %v119, %v118
    %v131 = vpack.c.b16 %v121, %v120
    %v132 = vpack.c.b16 %v123, %v122
    %v133 = vpack.c.b16 %v125, %v124
    %142 = vmatpush.bf16.msra.mxu0 %v133
    %143 = vmatpush.bf16.msra.mxu0 %v132
    %144 = vmatpush.bf16.msra.mxu0 %v131
    %145 = vmatpush.bf16.msra.mxu0 %v130
    %146 = vmatpush.bf16.msra.mxu0 %v129
    %147 = vmatpush.bf16.msra.mxu0 %v128
    %148 = vmatpush.bf16.msra.mxu0 %v127
    %149 = vmatpush.bf16.msra.mxu0 %v126
    %150 = vmatmul.bf16.gmra.mxu0 %v92
    %v151 = vpop.f32.mrf.mxu0
    %v152 = vadd.f32 0.0, %v151
    %v153 = vpop.f32.mrf.mxu0
    %v154 = vadd.f32 0.0, %v153
    %155 = vdwg.mxu0
    %v156 = vadd.f32 %v68, %v152
    %v157 = vadd.f32 %v69, %v154
    %158 = vst [vmem:[#allocation2] sm:$0xff] %v156
    %159 = vst [vmem:[#allocation2 + $0x8] sm:$0xff] %v157
    // Predicated region
    $region30: #{tpu_custom_call.1} parent=1 // pred_check
      %p160 = pneg %p62
    $region31: #{tpu_custom_call.1} parent=1 // pred_check_branch
      %162 = sbr.rel (%p160) target = $region33
    $region32: #{tpu_custom_call.1} parent=1 // pred_region
      %v163 = vld [vmem:[#allocation2] sm:$0xff]
      %v164 = vld [vmem:[#allocation2 + $0x8] sm:$0xff]
      %v165 = vld [vmem:[#allocation8] sm:$0xff]
      %v166 = vld [vmem:[#allocation8 + $0x8] sm:$0xff]
      %v167 = vadd.f32 %v163, %v165
      %v168 = vadd.f32 %v164, %v166
      %169 = vst [vmem:[#allocation9] sm:$0xff] %v167
      %170 = vst [vmem:[#allocation9 + $0x8] sm:$0xff] %v168
    $region33: #{tpu_custom_call.1} parent=1 // pred_fallthru
      _
    // Predicated region
    $region34: #{tpu_custom_call.1} parent=1 // pred_check
      _
    $region35: #{tpu_custom_call.1} parent=1 // pred_check_branch
      %172 = sbr.rel (0) target = $region37
    $region36: #{tpu_custom_call.1} parent=1 // pred_region
      %174 = vsyncadd [#allocation5], 0
      %s175 = sshll.u32 [#allocation9], 4
      %s176 = int_to_ptr.vmem [resolvable:$true] %s175
      %s177 = sshll.u32 %s3, 4
      %s178 = int_to_ptr.hbm [resolvable:$true] %s177
      %183 = dma.vmem_to_hbm [thread:$0]  %s176, 256, %s178, [#allocation5], 128, 128, 8
    $region37: #{tpu_custom_call.1} parent=1 // pred_fallthru
      _
    // Predicated region
    $region38: #{tpu_custom_call.1} parent=1 // pred_check
      _
    $region39: #{tpu_custom_call.1} parent=1 // pred_check_branch
      %185 = sbr.rel (0) target = $region41
    $region40: #{tpu_custom_call.1} parent=1 // pred_region
      %187 = dma.done [#allocation5], 256
    $region41: #{tpu_custom_call.1} parent=1 // pred_fallthru
      _
    %188 = vsyncpa [#allocation4], 1
    %189 = vsyncpa [#allocation7], 1
    %190 = vsyncpa [#allocation5], 1

</llo_original>
